<compile_context>
chip_gen: v7x
topology: tpu7x:2x2x1
jax: 0.10.0
libtpu: 0.0.40
codegen_flags: <defaults>
</compile_context>

<pallas_src>
import jax
import jax.numpy as jnp
from jax.experimental import pallas as pl
from jax.experimental.pallas import tpu as pltpu


def _round_up(x, m):
    return (x + m - 1) // m * m


def _pad2(a, rows, cols):
    pr, pc = rows - a.shape[0], cols - a.shape[1]
    if pr == 0 and pc == 0:
        return a
    return jnp.pad(a, ((0, pr), (0, pc)))


# ---------------------------------------------------------------- kernels ---

def _kan_kernel_fullk(x_ref, w_ref, b_ref, o_ref):
    # x_ref: (tm, Kp)  w_ref: (Kp, tn)  b_ref: (1, tn) f32  o_ref: (tm, tn)
    acc = jnp.dot(x_ref[...], w_ref[...], preferred_element_type=jnp.float32)
    o_ref[...] = jnp.sin(acc + b_ref[...]).astype(o_ref.dtype)


def _kan_kernel_multik(x_ref, w_ref, b_ref, o_ref, acc_ref):
    # x_ref: (tm, tk)  w_ref: (tk, tn)  b_ref: (1, tn) f32
    # o_ref: (tm, tn)  acc_ref: (tm, tn) f32, resident across the K axis.
    k = pl.program_id(2)

    @pl.when(k == 0)
    def _():
        acc_ref[...] = jnp.zeros_like(acc_ref)

    acc_ref[...] += jnp.dot(x_ref[...], w_ref[...],
                            preferred_element_type=jnp.float32)

    @pl.when(k == pl.num_programs(2) - 1)
    def _():
        o_ref[...] = jnp.sin(acc_ref[...] + b_ref[...]).astype(o_ref.dtype)


# ------------------------------------------------------------ tile pickers --

def _select_nk_tiles(N, K, tn, tk):
    Np128 = _round_up(N, 128)
    Kp128 = _round_up(K, 128)
    # Whole N in one lane-dense tile when small enough (avoids over-padding,
    # e.g. N=320 -> tn=384 instead of 512).
    if tn is None:
        tn = Np128 if Np128 <= 768 else 512
    tn = _round_up(min(tn, Np128), 128)
    # Collapse the K reduction for KAN-typical in_features.
    if tk is None:
        tk = Kp128 if Kp128 <= 2048 else 1024
    tk = _round_up(min(tk, Kp128), 128)
    return tn, tk


def _vmem_cap_bytes():
    try:
        cap = int(pltpu.get_tpu_info().vmem_capacity_bytes) * 3 // 4
    except Exception:  # pragma: no cover - info query unavailable
        cap = 96 * 1024 * 1024
    return min(cap, 100 * 1024 * 1024)


# ------------------------------------------------------------------ layer ---

def kan_layer(x, weight, bias, *, tm=None, tn=None, tk=None,
              compute_dtype=jnp.bfloat16, out_dtype=None):
    """y = sin(x @ weight.T + bias), matching torch.sin(nn.Linear(in,out)(x)).

    x:      (B, in_features)
    weight: (out_features, in_features)   -- PyTorch Linear convention
    bias:   (out_features,)

    compute_dtype controls the MXU operand precision (bf16 default; pass
    jnp.float32 if exact f32-Linear parity is required).
    """
    B, K = x.shape
    N, K2 = weight.shape
    assert K == K2 and bias.shape == (N,)
    out_dtype = out_dtype or x.dtype
    in_bytes = jnp.dtype(compute_dtype).itemsize
    out_bytes = jnp.dtype(out_dtype).itemsize

    tn, tk = _select_nk_tiles(N, K, tn, tk)
    if tm is None:
        tm = 512
    tm = _round_up(min(tm, _round_up(B, 16)), 16)

    # VMEM gate: double-buffered input/output tiles (+ acc scratch if K tiled).
    vmem_cap = _vmem_cap_bytes()

    def _budget(tm_, tn_, tk_):
        nk_ = -(-K // tk_)
        b = 2 * (tm_ * tk_ * in_bytes + tk_ * tn_ * in_bytes
                 + tn_ * 4 + tm_ * tn_ * out_bytes)
        if nk_ > 1:
            b += tm_ * tn_ * 4
        return b

    while _budget(tm, tn, tk) > vmem_cap:
        if tm > 128:
            tm = _round_up(tm // 2, 16)
        elif tn > 256:
            tn = _round_up(tn // 2, 128)
        elif tk > 512:
            tk = _round_up(tk // 2, 128)
        else:
            break

    Mp, Np, Kp = _round_up(B, tm), _round_up(N, tn), _round_up(K, tk)
    nm, nn, nk = Mp // tm, Np // tn, Kp // tk

    # Padded K columns contribute 0 to the matmul; padded M rows / N columns
    # are sliced off the output.  Weight is transposed ONCE here to (Kp, Np)
    # so the kernel runs a plain NN matmul (no per-step XLU transpose).
    # TODO(synk): cache xp-independent wp/bp across calls (weights are params).
    xp = _pad2(x.astype(compute_dtype), Mp, Kp)
    wp = _pad2(weight.astype(compute_dtype).T, Kp, Np)
    bp = _pad2(bias.astype(jnp.float32).reshape(1, N), 1, Np)

    vmem_limit = int(min(max(_budget(tm, tn, tk) + (4 << 20), 32 << 20),
                         vmem_cap))

    if nk == 1:
        # Single K step: no accumulator scratch, no init/finalize branches.
        out = pl.pallas_call(
            _kan_kernel_fullk,
            out_shape=jax.ShapeDtypeStruct((Mp, Np), out_dtype),
            grid_spec=pltpu.PrefetchScalarGridSpec(
                num_scalar_prefetch=0,
                grid=(nm, nn),
                in_specs=[
                    pl.BlockSpec((tm, Kp), lambda i, j: (i, 0)),   # x tile
                    pl.BlockSpec((Kp, tn), lambda i, j: (0, j)),   # weight.T
                    pl.BlockSpec((1, tn), lambda i, j: (0, j)),    # bias slice
                ],
                out_specs=pl.BlockSpec((tm, tn), lambda i, j: (i, j)),
            ),
            compiler_params=pltpu.CompilerParams(
                dimension_semantics=("parallel", "parallel"),
                vmem_limit_bytes=vmem_limit),
        )(xp, wp, bp)
    else:
        out = pl.pallas_call(
            _kan_kernel_multik,
            out_shape=jax.ShapeDtypeStruct((Mp, Np), out_dtype),
            grid_spec=pltpu.PrefetchScalarGridSpec(
                num_scalar_prefetch=0,
                grid=(nm, nn, nk),
                in_specs=[
                    pl.BlockSpec((tm, tk), lambda i, j, k: (i, k)),  # x tile
                    pl.BlockSpec((tk, tn), lambda i, j, k: (k, j)),  # weight.T
                    pl.BlockSpec((1, tn), lambda i, j, k: (0, j)),   # bias
                ],
                out_specs=pl.BlockSpec((tm, tn), lambda i, j, k: (i, j)),
                scratch_shapes=[pltpu.VMEM((tm, tn), jnp.float32)],
            ),
            compiler_params=pltpu.CompilerParams(
                dimension_semantics=("parallel", "parallel", "arbitrary"),
                vmem_limit_bytes=vmem_limit),
        )(xp, wp, bp)

    if (Mp, Np) != (B, N):
        out = out[:B, :N]
    return out


# -------------------------------------------------------------- reference ---

def _reference(x, w, b, compute_dtype=jnp.bfloat16):
    # Same math as the kernel: compute-dtype operands, f32 acc, f32 bias + sin.
    acc = jnp.dot(x.astype(compute_dtype), w.astype(compute_dtype).T,
                  preferred_element_type=jnp.float32)
    return jnp.sin(acc + b.astype(jnp.float32))


if __name__ == "__main__":
    key = jax.random.PRNGKey(0)

    def make_params(kw, kb, out_f, in_f):
        # PyTorch Linear default init: U(-1/sqrt(in), 1/sqrt(in))
        bound = 1.0 / jnp.sqrt(jnp.float32(in_f))
        w = jax.random.uniform(kw, (out_f, in_f), jnp.float32, -bound, bound)
        b = jax.random.uniform(kb, (out_f,), jnp.float32, -bound, bound)
        return w, b

    ok = True

    # 1) Small shapes straight from the module: batch=8, in=32, out=16.
    k1, k2, k3, key = jax.random.split(key, 4)
    x = jax.random.normal(k1, (8, 32), jnp.float32)
    w, b = make_params(k2, k3, 16, 32)
    y = kan_layer(x, w, b)
    jax.block_until_ready(y)
    ok &= (y.shape == (8, 16))
    ok &= bool(jnp.allclose(y, _reference(x, w, b), atol=2e-4, rtol=1e-3))

    # 2) Multi-M-tile case with KAN-typical N=320 (single N tile tn=384,
    #    single collapsed K step -> full-K kernel, no accumulator).
    k1, k2, k3, key = jax.random.split(key, 4)
    x = jax.random.normal(k1, (512, 384), jnp.float32)
    w, b = make_params(k2, k3, 320, 384)
    y = kan_layer(x, w, b, tm=256)
    jax.block_until_ready(y)
    ok &= (y.shape == (512, 320))
    ok &= bool(jnp.allclose(y, _reference(x, w, b), atol=2e-4, rtol=1e-3))

    # 3) Force the multi-K accumulator path (tk=128 -> 4 K steps).
    k1, k2, k3, key = jax.random.split(key, 4)
    x = jax.random.normal(k1, (256, 512), jnp.float32)
    w, b = make_params(k2, k3, 256, 512)
    y = kan_layer(x, w, b, tm=128, tn=128, tk=128)
    jax.block_until_ready(y)
    ok &= (y.shape == (256, 256))
    ok &= bool(jnp.allclose(y, _reference(x, w, b), atol=2e-4, rtol=1e-3))

    assert ok
    print("KERNEL_OK")
</pallas_src>

<mosaic_0001>
module attributes {stable_mosaic.version = 11 : i64} {
  func.func @_kan_kernel_fullk(%arg0: i32, %arg1: i32, %arg2: memref<16x128xbf16, #tpu.memory_space<vmem>>, %arg3: memref<128x128xbf16, #tpu.memory_space<vmem>>, %arg4: memref<1x128xf32, #tpu.memory_space<vmem>>, %arg5: memref<16x128xf32, #tpu.memory_space<vmem>>) attributes {dimension_semantics = [#tpu.dimension_semantics<parallel>, #tpu.dimension_semantics<parallel>], iteration_bounds = array<i64: 1, 1>, scalar_prefetch = 0 : i64, scratch_operands = 0 : i64, tpu.core_type = #tpu.core_type<tc>, window_params = [{transform_indices = @transform_0, window_bounds = array<i64: 16, 128>}, {transform_indices = @transform_1, window_bounds = array<i64: 128, 128>}, {transform_indices = @transform_2, window_bounds = array<i64: 1, 128>}, {transform_indices = @transform_3, window_bounds = array<i64: 16, 128>}]} {
    %c0 = arith.constant 0 : index
    %c0_0 = arith.constant 0 : index
    %0 = vector.load %arg2[%c0, %c0_0] : memref<16x128xbf16, #tpu.memory_space<vmem>>, vector<16x128xbf16>
    %c0_1 = arith.constant 0 : index
    %c0_2 = arith.constant 0 : index
    %1 = vector.load %arg3[%c0_1, %c0_2] : memref<128x128xbf16, #tpu.memory_space<vmem>>, vector<128x128xbf16>
    %cst = arith.constant dense<0.000000e+00> : vector<16x128xf32>
    %2 = tpu.matmul %0, %1, %cst {dimension_numbers = #tpu.dot_dimension_numbers<[1], [0], [0], [1], [0, 0, 1, 1], [], []>} : vector<16x128xbf16>, vector<128x128xbf16>, vector<16x128xf32> -> vector<16x128xf32>
    %c0_3 = arith.constant 0 : index
    %c0_4 = arith.constant 0 : index
    %3 = vector.load %arg4[%c0_3, %c0_4] : memref<1x128xf32, #tpu.memory_space<vmem>>, vector<1x128xf32>
    %4 = vector.broadcast %3 : vector<1x128xf32> to vector<16x128xf32>
    %5 = arith.addf %2, %4 : vector<16x128xf32>
    %6 = math.sin %5 : vector<16x128xf32>
    %c0_5 = arith.constant 0 : index
    %c0_6 = arith.constant 0 : index
    %7 = vector.load %arg5[%c0_5, %c0_6] : memref<16x128xf32, #tpu.memory_space<vmem>>, vector<16x128xf32>
    tpu.vector_store %arg5[%c0_5, %c0_6], %6 {strides = array<i32>} : memref<16x128xf32, #tpu.memory_space<vmem>>, vector<16x128xf32>,
    return
  }
  func.func @transform_0(%arg0: i32, %arg1: i32) -> (i32, i32) {
    %c0_i32 = arith.constant 0 : i32
    %c0_i32_0 = arith.constant 0 : i32
    return %arg0, %c0_i32 : i32, i32
  }
  func.func @transform_1(%arg0: i32, %arg1: i32) -> (i32, i32) {
    %c0_i32 = arith.constant 0 : i32
    %c0_i32_0 = arith.constant 0 : i32
    return %c0_i32, %arg1 : i32, i32
  }
  func.func @transform_2(%arg0: i32, %arg1: i32) -> (i32, i32) {
    %c0_i32 = arith.constant 0 : i32
    %c0_i32_0 = arith.constant 0 : i32
    return %c0_i32, %arg1 : i32, i32
  }
  func.func @transform_3(%arg0: i32, %arg1: i32) -> (i32, i32) {
    %c0_i32 = arith.constant 0 : i32
    return %arg0, %arg1 : i32, i32
  }
}

</mosaic_0001>

<llo_original>
// kernel: tpu_custom_call.1
$region0: #{tpu_custom_call.1}
  #allocation0 [shape = 'u32[]', space=smem, size = 0x4, offset = 0x4, fixed_abs, tag = 'smem constant byte address 0x4 - core index']
  #allocation1 [shape = 'u32[144,128]{1,0:T(1,128)}', space=vmem, size = 0x12000, scoped, tag = 'internal scratch']
  %s0 = inlined_call_operand.hbm [shape: bf16[16,128], index: 0, kind: input, shape index: {}]
  %s1 = inlined_call_operand.hbm [shape: bf16[128,128], index: 1, kind: input, shape index: {}]
  %s2 = inlined_call_operand.vmem [shape: f32[1,128], index: 2, kind: input, shape index: {}]
  %s3 = inlined_call_operand.hbm [shape: f32[16,128], index: 3, kind: output, shape index: {}]
  %s4 = sld [smem:[#allocation0]]
  $region30: #{tpu_custom_call.1} parent=0
    _
  %s6 = ssub.s32 1, %s4
  %s7 = scalar_select 0, %s6, %s4
  $region1: #{tpu_custom_call.1} parent=0
    #allocation2 [shape = 'u8[4096]{0}', space=vmem, size = 0x1000, scoped, tag = 'input window, operand 0, single buffered']
    #allocation3 [shape = 's32[1]{0}', space=sflag, size = 0x4, scoped, tag = 'scoped memory for tpu_custom_call.1']
    #allocation4 [shape = 's32[1]{0}', space=sflag, size = 0x4, scoped, tag = 'scoped memory for tpu_custom_call.1']
    #allocation5 [shape = 'u8[32768]{0}', space=vmem, size = 0x8000, scoped, tag = 'input window, operand 1, single buffered']
    #allocation6 [shape = 's32[1]{0}', space=sflag, size = 0x4, scoped, tag = 'scoped memory for tpu_custom_call.1']
    #allocation7 [shape = 'u8[8192]{0}', space=vmem, size = 0x2000, scoped, tag = 'output window, operand 0, single buffered']
    %8 = vsyncpa [#allocation3], 0
    %9 = vsyncpa [#allocation6], 0
    %10 = vsyncpa [#allocation4], 0
    // Predicated region
    $region2: #{tpu_custom_call.1} parent=1 // pred_check
      _
    $region3: #{tpu_custom_call.1} parent=1 // pred_check_branch
      %12 = sbr.rel (0) target = $region5
    $region4: #{tpu_custom_call.1} parent=1 // pred_region
      %s14 = ssub.s32 128, 128
      %15 = vsyncadd [#allocation3], %s14
      %s16 = sshll.u32 [#allocation2], 4
      %s17 = int_to_ptr.vmem [resolvable:$true] %s16
      %22 = dma.hbm_to_vmem [thread:$0]  %s0, 128, %s17, [#allocation3], 64, 64, 4
    $region5: #{tpu_custom_call.1} parent=1 // pred_fallthru
      _
    // Predicated region
    $region6: #{tpu_custom_call.1} parent=1 // pred_check
      _
    $region7: #{tpu_custom_call.1} parent=1 // pred_check_branch
      %24 = sbr.rel (0) target = $region9
    $region8: #{tpu_custom_call.1} parent=1 // pred_region
      %s26 = ssub.s32 1024, 1024
      %27 = vsyncadd [#allocation6], %s26
      %s28 = sshll.u32 [#allocation5], 4
      %s29 = int_to_ptr.vmem [resolvable:$true] %s28
      %34 = dma.hbm_to_vmem [thread:$0]  %s1, 1024, %s29, [#allocation6], 64, 64, 4
    $region9: #{tpu_custom_call.1} parent=1 // pred_fallthru
      _
    // Predicated region
    $region10: #{tpu_custom_call.1} parent=1 // pred_check
      _
    $region11: #{tpu_custom_call.1} parent=1 // pred_check_branch
      %36 = sbr.rel (0) target = $region13
    $region12: #{tpu_custom_call.1} parent=1 // pred_region
      _
    $region13: #{tpu_custom_call.1} parent=1 // pred_fallthru
      _
    // Predicated region
    $region14: #{tpu_custom_call.1} parent=1 // pred_check
      _
    $region15: #{tpu_custom_call.1} parent=1 // pred_check_branch
      %38 = sbr.rel (0) target = $region17
    $region16: #{tpu_custom_call.1} parent=1 // pred_region
      %39 = dma.done [#allocation3], 128
    $region17: #{tpu_custom_call.1} parent=1 // pred_fallthru
      _
    // Predicated region
    $region18: #{tpu_custom_call.1} parent=1 // pred_check
      _
    $region19: #{tpu_custom_call.1} parent=1 // pred_check_branch
      %41 = sbr.rel (0) target = $region21
    $region20: #{tpu_custom_call.1} parent=1 // pred_region
      %42 = dma.done [#allocation6], 1024
    $region21: #{tpu_custom_call.1} parent=1 // pred_fallthru
      _
    %v44 = vld [vmem:[#allocation2] sm:$0xf]
    %v45 = vld [vmem:[#allocation2 + $0x4] sm:$0xf]
    %v46 = vld [vmem:[#allocation5] sm:$0xf]
    %v47 = vld [vmem:[#allocation5 + $0x4] sm:$0xf]
    %v48 = vld [vmem:[#allocation5 + $0x8] sm:$0xf]
    %v49 = vld [vmem:[#allocation5 + $0xc] sm:$0xf]
    %v50 = vld [vmem:[#allocation5 + $0x10] sm:$0xf]
    %v51 = vld [vmem:[#allocation5 + $0x14] sm:$0xf]
    %v52 = vld [vmem:[#allocation5 + $0x18] sm:$0xf]
    %v53 = vld [vmem:[#allocation5 + $0x1c] sm:$0xf]
    %v54 = vld [vmem:[#allocation5 + $0x20] sm:$0xf]
    %v55 = vld [vmem:[#allocation5 + $0x24] sm:$0xf]
    %v56 = vld [vmem:[#allocation5 + $0x28] sm:$0xf]
    %v57 = vld [vmem:[#allocation5 + $0x2c] sm:$0xf]
    %v58 = vld [vmem:[#allocation5 + $0x30] sm:$0xf]
    %v59 = vld [vmem:[#allocation5 + $0x34] sm:$0xf]
    %v60 = vld [vmem:[#allocation5 + $0x38] sm:$0xf]
    %v61 = vld [vmem:[#allocation5 + $0x3c] sm:$0xf]
    %v62 = vld [vmem:[%s2] sm:$0x1]
    %v64 = vlaneseq
    %v65 = vshrl.u32 %v64, 7
    %v66 = vsub.s32 0, %v65
    %v67 = vrot.slane %v62, %v66
    %v71 = vunpack.c.l.b16 %v44
    %v72 = vunpack.c.l.b16 %v45
    %v73 = vpack.c.b16 %v72, %v71
    %v91 = vunpack.c.l.b16 %v46
    %v92 = vunpack.c.l.b16 %v47
    %v93 = vunpack.c.l.b16 %v48
    %v94 = vunpack.c.l.b16 %v49
    %v95 = vunpack.c.l.b16 %v50
    %v96 = vunpack.c.l.b16 %v51
    %v97 = vunpack.c.l.b16 %v52
    %v98 = vunpack.c.l.b16 %v53
    %v99 = vunpack.c.l.b16 %v54
    %v100 = vunpack.c.l.b16 %v55
    %v101 = vunpack.c.l.b16 %v56
    %v102 = vunpack.c.l.b16 %v57
    %v103 = vunpack.c.l.b16 %v58
    %v104 = vunpack.c.l.b16 %v59
    %v105 = vunpack.c.l.b16 %v60
    %v106 = vunpack.c.l.b16 %v61
    %v107 = vpack.c.b16 %v92, %v91
    %v108 = vpack.c.b16 %v94, %v93
    %v109 = vpack.c.b16 %v96, %v95
    %v110 = vpack.c.b16 %v98, %v97
    %v111 = vpack.c.b16 %v100, %v99
    %v112 = vpack.c.b16 %v102, %v101
    %v113 = vpack.c.b16 %v104, %v103
    %v114 = vpack.c.b16 %v106, %v105
    %123 = vmatprep.subr.bf16.mxu0 0
    %124 = vmatpush1.bf16.msra.mxu0 %v107
    %125 = vmatprep.subr.bf16.mxu0 0
    %126 = vmatpush1.bf16.msra.mxu0 %v108
    %127 = vmatprep.subr.bf16.mxu0 0
    %128 = vmatpush1.bf16.msra.mxu0 %v109
    %129 = vmatprep.subr.bf16.mxu0 0
    %130 = vmatpush1.bf16.msra.mxu0 %v110
    %131 = vmatprep.subr.bf16.mxu0 0
    %132 = vmatpush1.bf16.msra.mxu0 %v111
    %133 = vmatprep.subr.bf16.mxu0 0
    %134 = vmatpush1.bf16.msra.mxu0 %v112
    %135 = vmatprep.subr.bf16.mxu0 0
    %136 = vmatpush1.bf16.msra.mxu0 %v113
    %137 = vmatprep.subr.bf16.mxu0 0
    %138 = vmatpush1.bf16.msra.mxu0 %v114
    %139 = vmatprep.subr.bf16.mxu0 0
    %140 = vmatpush1.bf16.msra.mxu0 0
    %141 = vmatprep.subr.bf16.mxu0 0
    %142 = vmatpush1.bf16.msra.mxu0 0
    %143 = vmatprep.subr.bf16.mxu0 0
    %144 = vmatpush1.bf16.msra.mxu0 0
    %145 = vmatprep.subr.bf16.mxu0 0
    %146 = vmatpush1.bf16.msra.mxu0 0
    %147 = vmatprep.subr.bf16.mxu0 0
    %148 = vmatpush1.bf16.msra.mxu0 0
    %149 = vmatprep.subr.bf16.mxu0 0
    %150 = vmatpush1.bf16.msra.mxu0 0
    %151 = vmatprep.subr.bf16.mxu0 0
    %152 = vmatpush1.bf16.msra.mxu0 0
    %153 = vmatprep.subr.bf16.mxu0 0
    %154 = vmatpush1.bf16.msra.mxu0 0
    %155 = vmatprep.mubr.bf16.mxu0 0
    %156 = vmatmul.mubr.bf16.gmra.mrb[0].mxu0 %v73
    %v157 = vpop.f32.mrb[0].mxu0
    %v158 = vadd.f32 %v67, %v157
    %v159 = vpop.f32.mrb[0].mxu0
    %v160 = vpop.f32.mrb[0].mxu0
    %v161 = vadd.f32 %v67, %v160
    %v162 = vpop.f32.mrb[0].mxu0
    %163 = vdwg.mxu0
    %v164 = vand.u32 2147483647, %v158
    %vm165 = vcmp.le.f32.partialorder %v164, 0.7853982
    %vm166 = vcmp.lt.s32.totalorder %v158, 0
    %v167 = vand.u32 %v158, 2139095040
    %v168 = vshrl.u32 %v167, 23
    %v169 = vsub.s32 %v168, 127
    %v170 = vand.u32 2147483647, %v158
    %v171 = vand.u32 %v170, 8388607
    %v172 = vor.u32 %v171, 8388608
    %v173 = vsub.s32 0, %v172
    %v174 = vadd.s32 %v169, 1
    %vm175 = vcmp.gt.s32.totalorder %v174, 0
    %v176 = vsel %vm175, %v174, 0
    %v177 = vshrl.u32 %v176, 5
    %v178 = vand.u32 %v176, 31
    %v179 = vsub.s32 32, %v178
    %v180 = vshrl.u32 683565275, %v179
    %v181 = vshll.u32 683565275, %v178
    %v182 = vshrl.u32 2475754826, %v179
    %v183 = vor.u32 %v181, %v182
    %v184 = vshll.u32 2475754826, %v178
    %v185 = vshrl.u32 2131351028, %v179
    %v186 = vor.u32 %v184, %v185
    %v187 = vshll.u32 2131351028, %v178
    %v188 = vshrl.u32 2102212464, %v179
    %v189 = vor.u32 %v187, %v188
    %v190 = vshll.u32 2102212464, %v178
    %v191 = vshrl.u32 920167782, %v179
    %v192 = vor.u32 %v190, %v191
    %v193 = vshll.u32 920167782, %v178
    %v194 = vshrl.u32 1326507024, %v179
    %v195 = vor.u32 %v193, %v194
    %vm196 = vcmp.lt.s32.totalorder %v177, 1
    %vm197 = vcmp.lt.s32.totalorder %v177, 2
    %vm198 = vcmp.lt.s32.totalorder %v177, 3
    %vm199 = vcmp.lt.s32.totalorder %v177, 4
    %v200 = vsel %vm196, %v180, %v183
    %v201 = vsel %vm199, %v189, 2102212464
    %v202 = vsel %vm198, %v186, %v201
    %v203 = vsel %vm197, %v200, %v202
    %v204 = vsel %vm196, %v183, %v186
    %v205 = vsel %vm199, %v192, 920167782
    %v206 = vsel %vm198, %v189, %v205
    %v207 = vsel %vm197, %v204, %v206
    %v208 = vsel %vm196, %v186, %v189
    %v209 = vsel %vm199, %v195, 1326507024
    %v210 = vsel %vm198, %v192, %v209
    %v211 = vsel %vm197, %v208, %v210
    %v212 = vshll.u32 %v172, 8
    %v213 = vmul.u32.u64.compose %v212, %v211
    %v214 = vextract.low.u32 %v213
    %v215 = vextract.high.u32 %v213
    %v216 = vmul.u32.u64.compose %v212, %v207
    %v217 = vextract.low.u32 %v216
    %v218 = vextract.high.u32 %v216
    %v219 = vmul.u32 %v212, %v203
    %v220 = vadd.s32 %v215, %v217
    %vm221 = vc.u32 %v215, %v217
    %v222 = vadd.s32 %v218, 1
    %v223 = vsel %vm221, %v222, %v218
    %v224 = vadd.s32 %v219, %v223
    %v225 = vadd.s32 %v224, 536870912
    %v226 = vshrl.u32 %v225, 30
    %v227 = vshll.u32 %v226, 30
    %v228 = vsub.s32 %v224, %v227
    %vm229 = vcmp.lt.s32.totalorder %v228, 0
    %v230 = vsub.s32 0, %v228
    %v231 = vsel %vm229, %v230, %v228
    %v232 = vclz %v231
    %v233 = vsub.s32 %v232, 2
    %vm234 = vcmp.gt.s32.totalorder 0, %v233
    %v235 = vsel %vm234, 0, %v233
    %v236 = vsub.s32 32, %v235
    %v237 = vshll.u32 %v228, %v235
    %v238 = vshrl.u32 %v220, %v236
    %v239 = vor.u32 %v237, %v238
    %v240 = vsub.s32 4294967266, %v235
    %v241 = vadd.s32 %v240, 127
    %v242 = vshll.u32 %v241, 23
    %v243 = vor.u32 4788187, %v242
    %v244 = vand.u32 2147483647, %v243
    %v246 = vcvt.s32.f32 %v239
    %v247 = vmul.f32 %v246, %v244
    %v248 = vxor.u32 %v247, 2147483648
    %v249 = vsel %vm166, %v248, %v247
    %v250 = vsub.s32 4, %v226
    %v251 = vsel %vm166, %v250, %v226
    %v252 = vsel %vm165, %v158, %v249
    %v253 = vsel %vm165, 0, %v251
    %v254 = vcosq.f32.pop %v252
    %v255 = vsinq.f32.pop %v252
    %vm256 = vweird.f32 %v158
    %v257 = vadd.s32 %v253, 3
    %v258 = vand.u32 %v257, 3
    %vm259 = vcmp.lt.s32.totalorder %v258, 2
    %vm260 = vcmp.eq.s32.totalorder %v258, 0
    %v261 = vxor.u32 %v255, 2147483648
    %v262 = vsel %vm260, %v254, %v261
    %vm263 = vcmp.eq.s32.totalorder %v258, 2
    %v264 = vxor.u32 %v254, 2147483648
    %v265 = vsel %vm263, %v264, %v255
    %v266 = vsel %vm259, %v262, %v265
    %v267 = vsel %vm256, nan, %v266
    %v268 = vand.u32 2147483647, %v161
    %vm269 = vcmp.le.f32.partialorder %v268, 0.7853982
    %vm270 = vcmp.lt.s32.totalorder %v161, 0
    %v271 = vand.u32 %v161, 2139095040
    %v272 = vshrl.u32 %v271, 23
    %v273 = vsub.s32 %v272, 127
    %v274 = vand.u32 2147483647, %v161
    %v275 = vand.u32 %v274, 8388607
    %v276 = vor.u32 %v275, 8388608
    %v277 = vsub.s32 0, %v276
    %v278 = vadd.s32 %v273, 1
    %vm279 = vcmp.gt.s32.totalorder %v278, 0
    %v280 = vsel %vm279, %v278, 0
    %v281 = vshrl.u32 %v280, 5
    %v282 = vand.u32 %v280, 31
    %v283 = vsub.s32 32, %v282
    %v284 = vshrl.u32 683565275, %v283
    %v285 = vshll.u32 683565275, %v282
    %v286 = vshrl.u32 2475754826, %v283
    %v287 = vor.u32 %v285, %v286
    %v288 = vshll.u32 2475754826, %v282
    %v289 = vshrl.u32 2131351028, %v283
    %v290 = vor.u32 %v288, %v289
    %v291 = vshll.u32 2131351028, %v282
    %v292 = vshrl.u32 2102212464, %v283
    %v293 = vor.u32 %v291, %v292
    %v294 = vshll.u32 2102212464, %v282
    %v295 = vshrl.u32 920167782, %v283
    %v296 = vor.u32 %v294, %v295
    %v297 = vshll.u32 920167782, %v282
    %v298 = vshrl.u32 1326507024, %v283
    %v299 = vor.u32 %v297, %v298
    %vm300 = vcmp.lt.s32.totalorder %v281, 1
    %vm301 = vcmp.lt.s32.totalorder %v281, 2
    %vm302 = vcmp.lt.s32.totalorder %v281, 3
    %vm303 = vcmp.lt.s32.totalorder %v281, 4
    %v304 = vsel %vm300, %v284, %v287
    %v305 = vsel %vm303, %v293, 2102212464
    %v306 = vsel %vm302, %v290, %v305
    %v307 = vsel %vm301, %v304, %v306
    %v308 = vsel %vm300, %v287, %v290
    %v309 = vsel %vm303, %v296, 920167782
    %v310 = vsel %vm302, %v293, %v309
    %v311 = vsel %vm301, %v308, %v310
    %v312 = vsel %vm300, %v290, %v293
    %v313 = vsel %vm303, %v299, 1326507024
    %v314 = vsel %vm302, %v296, %v313
    %v315 = vsel %vm301, %v312, %v314
    %v316 = vshll.u32 %v276, 8
    %v317 = vmul.u32.u64.compose %v316, %v315
    %v318 = vextract.low.u32 %v317
    %v319 = vextract.high.u32 %v317
    %v320 = vmul.u32.u64.compose %v316, %v311
    %v321 = vextract.low.u32 %v320
    %v322 = vextract.high.u32 %v320
    %v323 = vmul.u32 %v316, %v307
    %v324 = vadd.s32 %v319, %v321
    %vm325 = vc.u32 %v319, %v321
    %v326 = vadd.s32 %v322, 1
    %v327 = vsel %vm325, %v326, %v322
    %v328 = vadd.s32 %v323, %v327
    %v329 = vadd.s32 %v328, 536870912
    %v330 = vshrl.u32 %v329, 30
    %v331 = vshll.u32 %v330, 30
    %v332 = vsub.s32 %v328, %v331
    %vm333 = vcmp.lt.s32.totalorder %v332, 0
    %v334 = vsub.s32 0, %v332
    %v335 = vsel %vm333, %v334, %v332
    %v336 = vclz %v335
    %v337 = vsub.s32 %v336, 2
    %vm338 = vcmp.gt.s32.totalorder 0, %v337
    %v339 = vsel %vm338, 0, %v337
    %v340 = vsub.s32 32, %v339
    %v341 = vshll.u32 %v332, %v339
    %v342 = vshrl.u32 %v324, %v340
    %v343 = vor.u32 %v341, %v342
    %v344 = vsub.s32 4294967266, %v339
    %v345 = vadd.s32 %v344, 127
    %v346 = vshll.u32 %v345, 23
    %v347 = vor.u32 4788187, %v346
    %v348 = vand.u32 2147483647, %v347
    %v350 = vcvt.s32.f32 %v343
    %v351 = vmul.f32 %v350, %v348
    %v352 = vxor.u32 %v351, 2147483648
    %v353 = vsel %vm270, %v352, %v351
    %v354 = vsub.s32 4, %v330
    %v355 = vsel %vm270, %v354, %v330
    %v356 = vsel %vm269, %v161, %v353
    %v357 = vsel %vm269, 0, %v355
    %v358 = vcosq.f32.pop %v356
    %v359 = vsinq.f32.pop %v356
    %vm360 = vweird.f32 %v161
    %v361 = vadd.s32 %v357, 3
    %v362 = vand.u32 %v361, 3
    %vm363 = vcmp.lt.s32.totalorder %v362, 2
    %vm364 = vcmp.eq.s32.totalorder %v362, 0
    %v365 = vxor.u32 %v359, 2147483648
    %v366 = vsel %vm364, %v358, %v365
    %vm367 = vcmp.eq.s32.totalorder %v362, 2
    %v368 = vxor.u32 %v358, 2147483648
    %v369 = vsel %vm367, %v368, %v359
    %v370 = vsel %vm363, %v366, %v369
    %v371 = vsel %vm360, nan, %v370
    %372 = vst [vmem:[#allocation7] sm:$0xff] %v267
    %373 = vst [vmem:[#allocation7 + $0x8] sm:$0xff] %v371
    // Predicated region
    $region22: #{tpu_custom_call.1} parent=1 // pred_check
      _
    $region23: #{tpu_custom_call.1} parent=1 // pred_check_branch
      %375 = sbr.rel (0) target = $region25
    $region24: #{tpu_custom_call.1} parent=1 // pred_region
      %s377 = ssub.s32 256, 256
      %378 = vsyncadd [#allocation4], %s377
      %s379 = sshll.u32 [#allocation7], 4
      %s380 = int_to_ptr.vmem [resolvable:$true] %s379
      %385 = dma.vmem_to_hbm [thread:$0]  %s380, 256, %s3, [#allocation4], 128, 128, 8
    $region25: #{tpu_custom_call.1} parent=1 // pred_fallthru
      _
    // Predicated region
    $region26: #{tpu_custom_call.1} parent=1 // pred_check
      _
    $region27: #{tpu_custom_call.1} parent=1 // pred_check_branch
      %387 = sbr.rel (0) target = $region29
    $region28: #{tpu_custom_call.1} parent=1 // pred_region
      %388 = dma.done [#allocation4], 256
    $region29: #{tpu_custom_call.1} parent=1 // pred_fallthru
      _
    %389 = vsyncpa [#allocation3], 1
    %390 = vsyncpa [#allocation6], 1
    %391 = vsyncpa [#allocation4], 1

</llo_original>
